<compile_context>
chip_gen: v7x
topology: tpu7x:2x2x1
jax: 0.10.0
libtpu: 0.0.40
codegen_flags: <defaults>
</compile_context>

<pallas_src>
import jax
import jax.numpy as jnp
from jax.experimental import pallas as pl
from jax.experimental.pallas import tpu as pltpu


def gaussian_layer_kernel(x_ref, w_ref, b_ref, eps_ref,
                          out_ref, mean_ref, logvar_ref,
                          mean_sc, dev_sc):
    j = pl.program_id(1)
    d = mean_sc.shape[-1]

    # Linear(+exp) runs once per batch tile (first N-tile), results cached in
    # VMEM scratch and in the resident mean/log_var output blocks.
    @pl.when(j == 0)
    def _():
        mv = jnp.dot(x_ref[...], w_ref[...],
                     preferred_element_type=jnp.float32) + b_ref[...]   # (Bt, 2D)
        mean = mv[:, :d]
        log_var = mv[:, d:]
        mean_sc[...] = mean
        dev_sc[...] = jnp.exp(0.5 * log_var)          # EUP exp
        mean_ref[...] = mean
        logvar_ref[...] = log_var

    # Streaming reparameterization for this (batch tile, N tile) block.
    out_ref[...] = (mean_sc[...][:, None, :]
                    + dev_sc[...][:, None, :] * eps_ref[...])


def _pick_block(total, target, align=8):
    """Largest divisor of `total` that is <= target and align-multiple, else full."""
    if total <= target:
        return total
    if total % align == 0:
        cap = (min(target, total) // align) * align
        for t in range(cap, 0, -align):
            if total % t == 0:
                return t
    return total  # full-extent block always satisfies the (8,128) rule


def _vmem_limit_bytes(bt, nt, din, d):
    stream_tile = bt * nt * d * 4                         # one eps / out block
    resident = (din * 2 * d + bt * din + 2 * d) * 4       # W, x, bias blocks
    scratch = 4 * bt * d * 4                              # mean/dev scratch + mean/logvar
    need = 2 * 2 * stream_tile + 2 * resident + scratch + (2 << 20)
    return int(min(48 * 1024 * 1024, max(need, 16 * 1024 * 1024)))


def gaussian_layer_forward(x, w_mean, b_mean, w_logvar, b_logvar, epsilon,
                           *, block_b=64, block_n=128):
    """x: (B, Din) f32; w_*: (Din, D) (torch weight transposed); b_*: (D,);
    epsilon: (B, N, D).  Returns (samples (B,N,D), mean (B,D), log_var (B,D))."""
    B, Din = x.shape
    D = w_mean.shape[1]
    N = epsilon.shape[1]

    # Fuse the two linears into one MXU pass: [Wm | Wv] -> (Din, 2D), bias (1, 2D).
    w = jnp.concatenate([w_mean, w_logvar], axis=1)
    b = jnp.concatenate([b_mean, b_logvar]).reshape(1, 2 * D)

    bt = _pick_block(B, block_b, 8)
    nt = _pick_block(N, block_n, 8)
    grid = (B // bt, N // nt)

    out_shapes = (
        jax.ShapeDtypeStruct((B, N, D), jnp.float32),   # samples
        jax.ShapeDtypeStruct((B, D), jnp.float32),      # mean
        jax.ShapeDtypeStruct((B, D), jnp.float32),      # log_var
    )

    cost = pl.CostEstimate(
        flops=2 * B * Din * (2 * D),
        transcendentals=B * D,
        bytes_accessed=4 * (2 * B * N * D + B * Din + 2 * Din * D + 2 * D + 3 * B * D),
    )

    return pl.pallas_call(
        gaussian_layer_kernel,
        out_shape=out_shapes,
        grid_spec=pltpu.PrefetchScalarGridSpec(
            num_scalar_prefetch=0,
            grid=grid,
            in_specs=[
                pl.BlockSpec((bt, Din), lambda i, j: (i, 0)),      # x: const over j
                pl.BlockSpec((Din, 2 * D), lambda i, j: (0, 0)),   # fused W: resident
                pl.BlockSpec((1, 2 * D), lambda i, j: (0, 0)),     # fused bias
                pl.BlockSpec((bt, nt, D), lambda i, j: (i, j, 0)),  # eps (streamed)
            ],
            out_specs=(
                pl.BlockSpec((bt, nt, D), lambda i, j: (i, j, 0)),  # samples (streamed)
                pl.BlockSpec((bt, D), lambda i, j: (i, 0)),         # mean (written at j==0)
                pl.BlockSpec((bt, D), lambda i, j: (i, 0)),         # log_var
            ),
            scratch_shapes=[
                pltpu.VMEM((bt, D), jnp.float32),   # mean scratch
                pltpu.VMEM((bt, D), jnp.float32),   # dev scratch
            ],
        ),
        compiler_params=pltpu.CompilerParams(
            dimension_semantics=("parallel", "arbitrary"),
            vmem_limit_bytes=_vmem_limit_bytes(bt, nt, Din, D),
        ),
        cost_estimate=cost,
    )(x, w, b, epsilon)


if __name__ == "__main__":
    B, Din, D, N = 16, 32, 128, 256

    key = jax.random.PRNGKey(0)
    kx, kwm, kbm, kwv, kbv, keps = jax.random.split(key, 6)

    x = jax.random.normal(kx, (B, Din), dtype=jnp.float32)
    w_mean = jax.random.normal(kwm, (Din, D), dtype=jnp.float32) * 0.05
    b_mean = jax.random.normal(kbm, (D,), dtype=jnp.float32) * 0.05
    w_logvar = jax.random.normal(kwv, (Din, D), dtype=jnp.float32) * 0.05
    b_logvar = jax.random.normal(kbv, (D,), dtype=jnp.float32) * 0.05
    epsilon = jax.random.normal(keps, (B, N, D), dtype=jnp.float32)

    # Small blocks here to exercise the (2, 2) grid + scratch-reuse path at demo
    # shapes; production defaults (block_b=64, block_n=128) give ~4 MiB tiles.
    samples, mean, log_var = gaussian_layer_forward(
        x, w_mean, b_mean, w_logvar, b_logvar, epsilon,
        block_b=8, block_n=128)
    jax.block_until_ready((samples, mean, log_var))

    # Pure-JAX reference check.
    mean_ref = x @ w_mean + b_mean
    logvar_ref = x @ w_logvar + b_logvar
    samples_ref = (mean_ref[:, None, :]
                   + jnp.exp(0.5 * logvar_ref)[:, None, :] * epsilon)
    assert jnp.allclose(samples, samples_ref, atol=1e-4, rtol=1e-4)
    assert jnp.allclose(mean, mean_ref, atol=1e-4, rtol=1e-4)
    assert jnp.allclose(log_var, logvar_ref, atol=1e-4, rtol=1e-4)

    print("KERNEL_OK")
</pallas_src>

<mosaic_0001>
module attributes {stable_mosaic.version = 11 : i64} {
  func.func @gaussian_layer_kernel(%arg0: i32, %arg1: i32, %arg2: memref<8x32xf32, #tpu.memory_space<vmem>>, %arg3: memref<32x256xf32, #tpu.memory_space<vmem>>, %arg4: memref<1x256xf32, #tpu.memory_space<vmem>>, %arg5: memref<8x128x128xf32, #tpu.memory_space<vmem>>, %arg6: memref<8x128x128xf32, #tpu.memory_space<vmem>>, %arg7: memref<8x128xf32, #tpu.memory_space<vmem>>, %arg8: memref<8x128xf32, #tpu.memory_space<vmem>>, %arg9: memref<8x128xf32, #tpu.memory_space<vmem>>, %arg10: memref<8x128xf32, #tpu.memory_space<vmem>>) attributes {dimension_semantics = [#tpu.dimension_semantics<parallel>, #tpu.dimension_semantics<arbitrary>], iteration_bounds = array<i64: 2, 2>, scalar_prefetch = 0 : i64, scratch_operands = 2 : i64, tpu.core_type = #tpu.core_type<tc>, window_params = [{transform_indices = @transform_0, window_bounds = array<i64: 8, 32>}, {pipeline_mode = #tpu.pipeline_mode<synchronous>, transform_indices = @transform_1, window_bounds = array<i64: 32, 256>}, {pipeline_mode = #tpu.pipeline_mode<synchronous>, transform_indices = @transform_2, window_bounds = array<i64: 1, 256>}, {transform_indices = @transform_3, window_bounds = array<i64: 8, 128, 128>}, {transform_indices = @transform_4, window_bounds = array<i64: 8, 128, 128>}, {transform_indices = @transform_5, window_bounds = array<i64: 8, 128>}, {transform_indices = @transform_6, window_bounds = array<i64: 8, 128>}]} {
    %c0_i32 = arith.constant 0 : i32
    %0 = arith.cmpi eq, %arg1, %c0_i32 : i32
    %1 = arith.extui %0 : i1 to i32
    %c0_i32_0 = arith.constant 0 : i32
    %2 = arith.cmpi ne, %1, %c0_i32_0 : i32
    scf.if %2 {
      %c0_10 = arith.constant 0 : index
      %c0_11 = arith.constant 0 : index
      %13 = vector.load %arg2[%c0_10, %c0_11] : memref<8x32xf32, #tpu.memory_space<vmem>>, vector<8x32xf32>
      %c0_12 = arith.constant 0 : index
      %c0_13 = arith.constant 0 : index
      %14 = vector.load %arg3[%c0_12, %c0_13] : memref<32x256xf32, #tpu.memory_space<vmem>>, vector<32x256xf32>
      %cst = arith.constant dense<0.000000e+00> : vector<8x256xf32>
      %15 = tpu.matmul %13, %14, %cst {dimension_numbers = #tpu.dot_dimension_numbers<[1], [0], [0], [1], [0, 0, 1, 1], [], []>} : vector<8x32xf32>, vector<32x256xf32>, vector<8x256xf32> -> vector<8x256xf32>
      %c0_14 = arith.constant 0 : index
      %c0_15 = arith.constant 0 : index
      %16 = vector.load %arg4[%c0_14, %c0_15] : memref<1x256xf32, #tpu.memory_space<vmem>>, vector<1x256xf32>
      %17 = vector.broadcast %16 : vector<1x256xf32> to vector<8x256xf32>
      %18 = arith.addf %15, %17 : vector<8x256xf32>
      %19 = vector.extract_strided_slice %18 {offsets = [0, 0], sizes = [8, 128], strides = [1, 1]} : vector<8x256xf32> to vector<8x128xf32>
      %20 = vector.extract_strided_slice %18 {offsets = [0, 128], sizes = [8, 128], strides = [1, 1]} : vector<8x256xf32> to vector<8x128xf32>
      %c0_16 = arith.constant 0 : index
      %c0_17 = arith.constant 0 : index
      %21 = vector.load %arg9[%c0_16, %c0_17] : memref<8x128xf32, #tpu.memory_space<vmem>>, vector<8x128xf32>
      tpu.vector_store %arg9[%c0_16, %c0_17], %19 {strides = array<i32>} : memref<8x128xf32, #tpu.memory_space<vmem>>, vector<8x128xf32>,
      %cst_18 = arith.constant 5.000000e-01 : f32
      %22 = vector.broadcast %cst_18 : f32 to vector<8x128xf32>
      %23 = arith.mulf %22, %20 : vector<8x128xf32>
      %24 = math.exp %23 : vector<8x128xf32>
      %c0_19 = arith.constant 0 : index
      %c0_20 = arith.constant 0 : index
      %25 = vector.load %arg10[%c0_19, %c0_20] : memref<8x128xf32, #tpu.memory_space<vmem>>, vector<8x128xf32>
      tpu.vector_store %arg10[%c0_19, %c0_20], %24 {strides = array<i32>} : memref<8x128xf32, #tpu.memory_space<vmem>>, vector<8x128xf32>,
      %c0_21 = arith.constant 0 : index
      %c0_22 = arith.constant 0 : index
      %26 = vector.load %arg7[%c0_21, %c0_22] : memref<8x128xf32, #tpu.memory_space<vmem>>, vector<8x128xf32>
      tpu.vector_store %arg7[%c0_21, %c0_22], %19 {strides = array<i32>} : memref<8x128xf32, #tpu.memory_space<vmem>>, vector<8x128xf32>,
      %c0_23 = arith.constant 0 : index
      %c0_24 = arith.constant 0 : index
      %27 = vector.load %arg8[%c0_23, %c0_24] : memref<8x128xf32, #tpu.memory_space<vmem>>, vector<8x128xf32>
      tpu.vector_store %arg8[%c0_23, %c0_24], %20 {strides = array<i32>} : memref<8x128xf32, #tpu.memory_space<vmem>>, vector<8x128xf32>,
    } else {
    }
    %c0 = arith.constant 0 : index
    %c0_1 = arith.constant 0 : index
    %3 = vector.load %arg9[%c0, %c0_1] : memref<8x128xf32, #tpu.memory_space<vmem>>, vector<8x128xf32>
    %4 = vector.shape_cast %3 : vector<8x128xf32> to vector<8x1x128xf32>
    %c0_2 = arith.constant 0 : index
    %c0_3 = arith.constant 0 : index
    %5 = vector.load %arg10[%c0_2, %c0_3] : memref<8x128xf32, #tpu.memory_space<vmem>>, vector<8x128xf32>
    %6 = vector.shape_cast %5 : vector<8x128xf32> to vector<8x1x128xf32>
    %c0_4 = arith.constant 0 : index
    %c0_5 = arith.constant 0 : index
    %c0_6 = arith.constant 0 : index
    %7 = vector.load %arg5[%c0_4, %c0_5, %c0_6] : memref<8x128x128xf32, #tpu.memory_space<vmem>>, vector<8x128x128xf32>
    %8 = vector.broadcast %6 : vector<8x1x128xf32> to vector<8x128x128xf32>
    %9 = arith.mulf %8, %7 : vector<8x128x128xf32>
    %10 = vector.broadcast %4 : vector<8x1x128xf32> to vector<8x128x128xf32>
    %11 = arith.addf %10, %9 : vector<8x128x128xf32>
    %c0_7 = arith.constant 0 : index
    %c0_8 = arith.constant 0 : index
    %c0_9 = arith.constant 0 : index
    %12 = vector.load %arg6[%c0_7, %c0_8, %c0_9] : memref<8x128x128xf32, #tpu.memory_space<vmem>>, vector<8x128x128xf32>
    tpu.vector_store %arg6[%c0_7, %c0_8, %c0_9], %11 {strides = array<i32>} : memref<8x128x128xf32, #tpu.memory_space<vmem>>, vector<8x128x128xf32>,
    return
  }
  func.func @transform_0(%arg0: i32, %arg1: i32) -> (i32, i32) {
    %c0_i32 = arith.constant 0 : i32
    %c0_i32_0 = arith.constant 0 : i32
    return %arg0, %c0_i32 : i32, i32
  }
  func.func @transform_1(%arg0: i32, %arg1: i32) -> (i32, i32) {
    %c0_i32 = arith.constant 0 : i32
    %c0_i32_0 = arith.constant 0 : i32
    %c0_i32_1 = arith.constant 0 : i32
    return %c0_i32, %c0_i32_0 : i32, i32
  }
  func.func @transform_2(%arg0: i32, %arg1: i32) -> (i32, i32) {
    %c0_i32 = arith.constant 0 : i32
    %c0_i32_0 = arith.constant 0 : i32
    %c0_i32_1 = arith.constant 0 : i32
    return %c0_i32, %c0_i32_0 : i32, i32
  }
  func.func @transform_3(%arg0: i32, %arg1: i32) -> (i32, i32, i32) {
    %c0_i32 = arith.constant 0 : i32
    %c0_i32_0 = arith.constant 0 : i32
    return %arg0, %arg1, %c0_i32 : i32, i32, i32
  }
  func.func @transform_4(%arg0: i32, %arg1: i32) -> (i32, i32, i32) {
    %c0_i32 = arith.constant 0 : i32
    %c0_i32_0 = arith.constant 0 : i32
    return %arg0, %arg1, %c0_i32 : i32, i32, i32
  }
  func.func @transform_5(%arg0: i32, %arg1: i32) -> (i32, i32) {
    %c0_i32 = arith.constant 0 : i32
    %c0_i32_0 = arith.constant 0 : i32
    return %arg0, %c0_i32 : i32, i32
  }
  func.func @transform_6(%arg0: i32, %arg1: i32) -> (i32, i32) {
    %c0_i32 = arith.constant 0 : i32
    %c0_i32_0 = arith.constant 0 : i32
    return %arg0, %c0_i32 : i32, i32
  }
}

</mosaic_0001>

<llo_original>
// kernel: tpu_custom_call.1
$region0: #{tpu_custom_call.1}
  #allocation0 [shape = 'u32[]', space=smem, size = 0x4, offset = 0x4, fixed_abs, tag = 'smem constant byte address 0x4 - core index']
  #allocation1 [shape = 'u32[144,128]{1,0:T(1,128)}', space=vmem, size = 0x12000, scoped, tag = 'internal scratch']
  #allocation2 [shape = 'f32[8,128]{1,0:T(8,128)}', space=vmem, size = 0x1000, scoped, tag = 'scratch operand']
  #allocation3 [shape = 'f32[8,128]{1,0:T(8,128)}', space=vmem, size = 0x1000, scoped, tag = 'scratch operand']
  #allocation16 [shape = 's32[]', space=sflag, size = 0x4, offset = 0, fixed_abs, tag = 'sflag constant byte address 0x0 - dummy sync flag']
  #allocation18 [shape = 's32[]', space=sflag, size = 0x4, offset = 0, fixed_abs, tag = 'sflag constant byte address 0x0 - dummy sync flag']
  %s0 = inlined_call_operand.hbm [shape: f32[16,32], index: 0, kind: input, shape index: {}]
  %s1 = inlined_call_operand.hbm [shape: f32[32,256], index: 1, kind: input, shape index: {}]
  %s2 = inlined_call_operand.hbm [shape: f32[1,256], index: 2, kind: input, shape index: {}]
  %s3 = inlined_call_operand.hbm [shape: f32[16,256,128], index: 3, kind: input, shape index: {}]
  %s4 = inlined_call_operand.hbm [shape: f32[16,256,128], index: 4, kind: output, shape index: {0}]
  %s5 = inlined_call_operand.hbm [shape: f32[16,128], index: 5, kind: output, shape index: {1}]
  %s6 = inlined_call_operand.hbm [shape: f32[16,128], index: 6, kind: output, shape index: {2}]
  %7 = xla_tuple %s4, %s5, %s6
  %s8 = sld [smem:[#allocation0]]
  $region85: #{tpu_custom_call.1} parent=0
    _
  %s10 = ssub.s32 1, %s8
  %s11 = scalar_select 0, %s10, %s8
  $region1: #{tpu_custom_call.1} parent=0
    #allocation4 [shape = 'u8[8192]{0}', space=vmem, size = 0x2000, scoped, tag = 'input window, operand 0']
    #allocation5 [shape = 's32[2]{0}', space=sflag, size = 0x8, scoped, tag = 'scoped memory for tpu_custom_call.1']
    #allocation6 [shape = 's32[2]{0}', space=sflag, size = 0x8, scoped, tag = 'scoped memory for tpu_custom_call.1']
    #allocation7 [shape = 'u8[32768]{0}', space=vmem, size = 0x8000, scoped, tag = 'input window, operand 1, single buffered']
    #allocation8 [shape = 's32[1]{0}', space=sflag, size = 0x4, scoped, tag = 'scoped memory for tpu_custom_call.1']
    #allocation9 [shape = 'u8[1024]{0}', space=vmem, size = 0x400, scoped, tag = 'input window, operand 2, single buffered']
    #allocation10 [shape = 'u8[1048576]{0}', space=vmem, size = 0x100000, scoped, tag = 'input window, operand 3']
    #allocation11 [shape = 's32[2]{0}', space=sflag, size = 0x8, scoped, tag = 'scoped memory for tpu_custom_call.1']
    #allocation12 [shape = 'u8[1048576]{0}', space=vmem, size = 0x100000, scoped, tag = 'output window, operand 0']
    #allocation13 [shape = 'u8[8192]{0}', space=vmem, size = 0x2000, scoped, tag = 'output window, operand 1']
    #allocation14 [shape = 's32[2]{0}', space=sflag, size = 0x8, scoped, tag = 'scoped memory for tpu_custom_call.1']
    #allocation15 [shape = 'u8[8192]{0}', space=vmem, size = 0x2000, scoped, tag = 'output window, operand 2']
    %12 = vsyncpa [#allocation5], 0
    %s13 = scalar_lea.sflag [#allocation5], 1
    %14 = vsyncpa %s13, 0
    %15 = vsyncpa [#allocation8], 0
    %16 = vsyncpa [#allocation11], 0
    %s17 = scalar_lea.sflag [#allocation11], 1
    %18 = vsyncpa %s17, 0
    %19 = vsyncpa [#allocation6], 0
    %s20 = scalar_lea.sflag [#allocation6], 1
    %21 = vsyncpa %s20, 0
    %22 = vsyncpa [#allocation14], 0
    %s23 = scalar_lea.sflag [#allocation14], 1
    %24 = vsyncpa %s23, 0
    loop: start=0, step=1, limit=6
    $region2: #{tpu_custom_call.1} parent=1 // loop_pre_header
      _
    $region3: #{tpu_custom_call.1} parent=1 // loop_header
      %s26 = sphi 0, %s30
      %p27 = scmp.ge.s32.totalorder %s26, 6
      %s33 = sphi 0, %s45
      %s34 = sphi 0, %s41
      %s35 = sphi 0, %s33
      %s36 = sphi 0, %s34
      %s37 = sphi 0, %s35
      %s38 = sphi 0, %s36
      %s48 = sphi 0, %s50
      %s51 = sphi 0, %s48
      %s52 = sphi 0, %s51
      %s68 = sphi 0, %s52
      %s72 = sphi 0, %s72
      %s74 = sphi 0, %s72
      %s75 = sphi 0, %s74
      %s89 = sphi 0, %s75
      %s93 = sphi 0, %s93
      %s95 = sphi 0, %s93
      %s96 = sphi 0, %s95
      %s110 = sphi 0, %s96
      %s118 = sphi 0, %s120
      %s121 = sphi 0, %s118
      %s122 = sphi 0, %s121
      %s138 = sphi 0, %s122
      %s146 = sphi 0, %s148
      %s149 = sphi 0, %s146
      %s150 = sphi 0, %s149
      %s166 = sphi 0, %s150
      %s172 = sphi 0, %s174
      %s175 = sphi 0, %s172
      %s176 = sphi 0, %s175
      %s192 = sphi 0, %s176
      %s198 = sphi 0, %s200
      %s201 = sphi 0, %s198
      %s202 = sphi 0, %s201
      %s218 = sphi 0, %s202
    $region4: #{tpu_custom_call.1} parent=1 // loop_header_branch
      %29 = sbr.rel (%p27) target = $region8
    $region5: #{tpu_custom_call.1} parent=1 // loop_body
      %s31 = ssub.s32 %s26, 1
      %s32 = ssub.s32 %s26, 2
      %s39 = sadd.s32 1, %s34
      %p40 = scmp.ge.s32.totalorder %s39, 2
      %s41 = scalar_select %p40, 0, %s39
      %s42 = sadd.s32 1, %s33
      %s43 = scalar_select %p40, %s42, %s33
      %p44 = scmp.ge.s32.totalorder %s43, 2
      %s45 = scalar_select %p44, 0, %s43
      %s46 = ssub.s32 %s33, %s45
      %p47 = scmp.eq.s32.totalorder %s46, 0
      %s49 = sadd.s32 %s48, 1
      %s50 = scalar_select %p47, %s48, %s49
      %p53 = pneg %p47
      %p54 = scmp.eq.s32.totalorder %s26, 3
      %p55 = por %p53, %p54
      %p56 = scmp.ne.s32.totalorder %s48, %s51
      %p57 = scmp.eq.s32.totalorder %s26, 0
      %p58 = por %p56, %p57
      %p59 = scmp.ne.s32.totalorder %s48, %s51
      %p60 = scmp.eq.s32.totalorder %s31, 3
      %p61 = por %p59, %p60
      %p62 = scmp.ne.s32.totalorder %s51, %s52
      %p63 = scmp.eq.s32.totalorder %s31, 0
      %p64 = por %p62, %p63
      %p65 = scmp.ne.s32.totalorder %s51, %s52
      %p66 = scmp.eq.s32.totalorder %s32, 3
      %p67 = por %p65, %p66
      %p69 = scmp.ne.s32.totalorder %s52, %s68
      %p70 = scmp.eq.s32.totalorder %s32, 0
      %p71 = por %p69, %p70
      %s73 = sadd.s32 %s72, 1
      %p76 = scmp.eq.s32.totalorder %s26, 3
      %p77 = scmp.ne.s32.totalorder %s72, %s74
      %p78 = scmp.eq.s32.totalorder %s26, 0
      %p79 = por %p77, %p78
      %p80 = scmp.ne.s32.totalorder %s72, %s74
      %p81 = scmp.eq.s32.totalorder %s31, 3
      %p82 = por %p80, %p81
      %p83 = scmp.ne.s32.totalorder %s74, %s75
      %p84 = scmp.eq.s32.totalorder %s31, 0
      %p85 = por %p83, %p84
      %p86 = scmp.ne.s32.totalorder %s74, %s75
      %p87 = scmp.eq.s32.totalorder %s32, 3
      %p88 = por %p86, %p87
      %p90 = scmp.ne.s32.totalorder %s75, %s89
      %p91 = scmp.eq.s32.totalorder %s32, 0
      %p92 = por %p90, %p91
      %s94 = sadd.s32 %s93, 1
      %p97 = scmp.eq.s32.totalorder %s26, 3
      %p98 = scmp.ne.s32.totalorder %s93, %s95
      %p99 = scmp.eq.s32.totalorder %s26, 0
      %p100 = por %p98, %p99
      %p101 = scmp.ne.s32.totalorder %s93, %s95
      %p102 = scmp.eq.s32.totalorder %s31, 3
      %p103 = por %p101, %p102
      %p104 = scmp.ne.s32.totalorder %s95, %s96
      %p105 = scmp.eq.s32.totalorder %s31, 0
      %p106 = por %p104, %p105
      %p107 = scmp.ne.s32.totalorder %s95, %s96
      %p108 = scmp.eq.s32.totalorder %s32, 3
      %p109 = por %p107, %p108
      %p111 = scmp.ne.s32.totalorder %s96, %s110
      %p112 = scmp.eq.s32.totalorder %s32, 0
      %p113 = por %p111, %p112
      %s114 = ssub.s32 %s33, %s45
      %s115 = ssub.s32 %s34, %s41
      %s116 = sor.u32 %s114, %s115
      %p117 = scmp.eq.s32.totalorder %s116, 0
      %s119 = sadd.s32 %s118, 1
      %s120 = scalar_select %p117, %s118, %s119
      %p123 = pneg %p117
      %p124 = scmp.eq.s32.totalorder %s26, 3
      %p125 = por %p123, %p124
      %p126 = scmp.ne.s32.totalorder %s118, %s121
      %p127 = scmp.eq.s32.totalorder %s26, 0
      %p128 = por %p126, %p127
      %p129 = scmp.ne.s32.totalorder %s118, %s121
      %p130 = scmp.eq.s32.totalorder %s31, 3
      %p131 = por %p129, %p130
      %p132 = scmp.ne.s32.totalorder %s121, %s122
      %p133 = scmp.eq.s32.totalorder %s31, 0
      %p134 = por %p132, %p133
      %p135 = scmp.ne.s32.totalorder %s121, %s122
      %p136 = scmp.eq.s32.totalorder %s32, 3
      %p137 = por %p135, %p136
      %p139 = scmp.ne.s32.totalorder %s122, %s138
      %p140 = scmp.eq.s32.totalorder %s32, 0
      %p141 = por %p139, %p140
      %s142 = ssub.s32 %s33, %s45
      %s143 = ssub.s32 %s34, %s41
      %s144 = sor.u32 %s142, %s143
      %p145 = scmp.eq.s32.totalorder %s144, 0
      %s147 = sadd.s32 %s146, 1
      %s148 = scalar_select %p145, %s146, %s147
      %p151 = pneg %p145
      %p152 = scmp.eq.s32.totalorder %s26, 3
      %p153 = por %p151, %p152
      %p154 = scmp.ne.s32.totalorder %s146, %s149
      %p155 = scmp.eq.s32.totalorder %s26, 0
      %p156 = por %p154, %p155
      %p157 = scmp.ne.s32.totalorder %s146, %s149
      %p158 = scmp.eq.s32.totalorder %s31, 3
      %p159 = por %p157, %p158
      %p160 = scmp.ne.s32.totalorder %s149, %s150
      %p161 = scmp.eq.s32.totalorder %s31, 0
      %p162 = por %p160, %p161
      %p163 = scmp.ne.s32.totalorder %s149, %s150
      %p164 = scmp.eq.s32.totalorder %s32, 3
      %p165 = por %p163, %p164
      %p167 = scmp.ne.s32.totalorder %s150, %s166
      %p168 = scmp.eq.s32.totalorder %s32, 0
      %p169 = por %p167, %p168
      %s170 = ssub.s32 %s33, %s45
      %p171 = scmp.eq.s32.totalorder %s170, 0
      %s173 = sadd.s32 %s172, 1
      %s174 = scalar_select %p171, %s172, %s173
      %p177 = pneg %p171
      %p178 = scmp.eq.s32.totalorder %s26, 3
      %p179 = por %p177, %p178
      %p180 = scmp.ne.s32.totalorder %s172, %s175
      %p181 = scmp.eq.s32.totalorder %s26, 0
      %p182 = por %p180, %p181
      %p183 = scmp.ne.s32.totalorder %s172, %s175
      %p184 = scmp.eq.s32.totalorder %s31, 3
      %p185 = por %p183, %p184
      %p186 = scmp.ne.s32.totalorder %s175, %s176
      %p187 = scmp.eq.s32.totalorder %s31, 0
      %p188 = por %p186, %p187
      %p189 = scmp.ne.s32.totalorder %s175, %s176
      %p190 = scmp.eq.s32.totalorder %s32, 3
      %p191 = por %p189, %p190
      %p193 = scmp.ne.s32.totalorder %s176, %s192
      %p194 = scmp.eq.s32.totalorder %s32, 0
      %p195 = por %p193, %p194
      %s196 = ssub.s32 %s33, %s45
      %p197 = scmp.eq.s32.totalorder %s196, 0
      %s199 = sadd.s32 %s198, 1
      %s200 = scalar_select %p197, %s198, %s199
      %p203 = pneg %p197
      %p204 = scmp.eq.s32.totalorder %s26, 3
      %p205 = por %p203, %p204
      %p206 = scmp.ne.s32.totalorder %s198, %s201
      %p207 = scmp.eq.s32.totalorder %s26, 0
      %p208 = por %p206, %p207
      %p209 = scmp.ne.s32.totalorder %s198, %s201
      %p210 = scmp.eq.s32.totalorder %s31, 3
      %p211 = por %p209, %p210
      %p212 = scmp.ne.s32.totalorder %s201, %s202
      %p213 = scmp.eq.s32.totalorder %s31, 0
      %p214 = por %p212, %p213
      %p215 = scmp.ne.s32.totalorder %s201, %s202
      %p216 = scmp.eq.s32.totalorder %s32, 3
      %p217 = por %p215, %p216
      %p219 = scmp.ne.s32.totalorder %s202, %s218
      %p220 = scmp.eq.s32.totalorder %s32, 0
      %p221 = por %p219, %p220
      %p222 = scmp.le.s32.totalorder 1, %s26
      %p223 = scmp.lt.s32.totalorder %s26, 5
      %p224 = pnand %p222, %p223
      %p225 = pneg %p224
      // Predicated region
      $region9: #{tpu_custom_call.1} parent=5 // pred_check
        _
      $region10: #{tpu_custom_call.1} parent=5 // pred_check_branch
        %227 = sbr.rel (%p224) target = $region12
      $region11: #{tpu_custom_call.1} parent=5 // pred_region
        %s228 = ssub.s32 %s26, 1
        // Predicated region
        $region13: #{tpu_custom_call.1} parent=11 // pred_check
          %p229 = pneg %p85
        $region14: #{tpu_custom_call.1} parent=11 // pred_check_branch
          %231 = sbr.rel (%p229) target = $region16
        $region15: #{tpu_custom_call.1} parent=11 // pred_region
          %s233 = ssub.s32 1024, 1024
          %234 = vsyncadd [#allocation8], %s233
          %s235 = sshll.u32 [#allocation7], 4
          %s236 = int_to_ptr.vmem [resolvable:$true] %s235
          %241 = dma.hbm_to_vmem [thread:$0]  %s1, 1024, %s236, [#allocation8], 256, 256, 16
        $region16: #{tpu_custom_call.1} parent=11 // pred_fallthru
          _
        // Predicated region
        $region17: #{tpu_custom_call.1} parent=11 // pred_check
          %p242 = pneg %p106
        $region18: #{tpu_custom_call.1} parent=11 // pred_check_branch
          %244 = sbr.rel (%p242) target = $region20
        $region19: #{tpu_custom_call.1} parent=11 // pred_region
          %s246 = ssub.s32 32, 32
          %247 = vsyncadd [#allocation8], %s246
          %s249 = sshll.u32 [#allocation9], 4
          %s250 = int_to_ptr.vmem [resolvable:$true] %s249
          %252 = dma.hbm_to_vmem [thread:$0]  %s2, 32, %s250, [#allocation8]
        $region20: #{tpu_custom_call.1} parent=11 // pred_fallthru
          _
      $region12: #{tpu_custom_call.1} parent=5 // pred_fallthru
        _
      %p253 = scmp.lt.s32.totalorder %s26, 4
      // Predicated region
      $region21: #{tpu_custom_call.1} parent=5 // pred_check
        %p254 = pneg %p253
      $region22: #{tpu_custom_call.1} parent=5 // pred_check_branch
        %256 = sbr.rel (%p254) target = $region24
      $region23: #{tpu_custom_call.1} parent=5 // pred_region
        // Predicated region
        $region25: #{tpu_custom_call.1} parent=23 // pred_check
          %p257 = pneg %p58
        $region26: #{tpu_custom_call.1} parent=23 // pred_check_branch
          %259 = sbr.rel (%p257) target = $region28
        $region27: #{tpu_custom_call.1} parent=23 // pred_region
          %s260 = sand.u32 %s48, 1
          %s261 = scalar_lea.sflag [#allocation5], %s260
          %s262 = sand.u32 %s48, 1
          %s263 = smul.addr %s262, 8
          %s264 = scalar_lea.vmem [#allocation4], %s263
          %s266 = ssub.s32 128, 128
          %267 = vsyncadd %s261, %s266
          %s268 = smul.addr %s33, 128
          %s269 = scalar_lea.hbm %s0, %s268
          %s271 = sshll.u32 %s264, 4
          %s272 = int_to_ptr.vmem [resolvable:$true] %s271
          %274 = dma.hbm_to_vmem [thread:$0]  %s269, 128, %s272, %s261
        $region28: #{tpu_custom_call.1} parent=23 // pred_fallthru
          _
        // Predicated region
        $region29: #{tpu_custom_call.1} parent=23 // pred_check
          %p275 = pneg %p128
        $region30: #{tpu_custom_call.1} parent=23 // pred_check_branch
          %277 = sbr.rel (%p275) target = $region32
        $region31: #{tpu_custom_call.1} parent=23 // pred_region
          #allocation17 [shape = 'u32[6]{0}', space=smem, size = 0x18, scoped, tag = 'DMA stride descriptor']
          %s278 = sand.u32 %s118, 1
          %s279 = scalar_lea.sflag [#allocation11], %s278
          %s280 = sand.u32 %s118, 1
          %s281 = smul.addr %s280, 1024
          %s282 = scalar_lea.vmem [#allocation10], %s281
          %s283 = smul.u32 8, %s33
          %s284 = smul.u32 16, %s34
          %s286 = ssub.s32 16384, 16384
          %287 = vsyncadd %s279, %s286
          %s288 = smul.addr %s283, 32
          %s289 = sadd.s32 %s284, %s288
          %s290 = smul.addr %s289, 128
          %s291 = scalar_lea.hbm %s3, %s290
          %s293 = sshll.u32 1, 14
          %s294 = sxor.u32 4294967295, %s293
          %s296 = sld [smem:[#allocation0]]
          %s297 = sadd.s32 2, %s296
          %s299 = sshll.u32 7, 26
          %s300 = sxor.u32 4294967295, %s299
          %s301 = sand.u32 0, %s300
          %s302 = sshll.u32 %s297, 26
          %s303 = sor.u32 %s301, %s302
          %s304 = sshll.u32 %s282, 4
          %s305 = int_to_ptr.vmem [resolvable:$true] %s304
          %311 = sst [smem:[#allocation17]] 4096
          %s312 = scalar_lea.smem [#allocation17], 1
          %313 = sst [smem:[%s312]] 2048
          %s314 = scalar_lea.smem [#allocation17], 2
          %315 = sst [smem:[%s314]] 16
          %s316 = scalar_lea.smem [#allocation17], 3
          %317 = sst [smem:[%s316]] 128
          %s318 = scalar_lea.smem [#allocation17], 4
          %319 = sst [smem:[%s318]] 128
          %s320 = scalar_lea.smem [#allocation17], 5
          %321 = sst [smem:[%s320]] 8
          %323 = dma.general %s291, 16384, %s305, %s279, [#allocation16], [#allocation17], %s303, 0
        $region32: #{tpu_custom_call.1} parent=23 // pred_fallthru
          _
      $region24: #{tpu_custom_call.1} parent=5 // pred_fallthru
        _
      %p324 = scmp.le.s32.totalorder 1, %s26
      %p325 = scmp.lt.s32.totalorder %s26, 5
      %p326 = pnand %p324, %p325
      %p327 = pneg %p326
      // Predicated region
      $region33: #{tpu_custom_call.1} parent=5 // pred_check
        _
      $region34: #{tpu_custom_call.1} parent=5 // pred_check_branch
        %329 = sbr.rel (%p326) target = $region36
      $region35: #{tpu_custom_call.1} parent=5 // pred_region
        %s330 = ssub.s32 %s26, 1
        %s331 = sand.u32 %s51, 1
        %s332 = scalar_lea.sflag [#allocation5], %s331
        %s333 = sand.u32 %s51, 1
        %s334 = smul.addr %s333, 8
        %s335 = scalar_lea.vmem [#allocation4], %s334
        // Predicated region
        $region37: #{tpu_custom_call.1} parent=35 // pred_check
          %p336 = pneg %p64
        $region38: #{tpu_custom_call.1} parent=35 // pred_check_branch
          %338 = sbr.rel (%p336) target = $region40
        $region39: #{tpu_custom_call.1} parent=35 // pred_region
          %339 = dma.done %s332, 128
        $region40: #{tpu_custom_call.1} parent=35 // pred_fallthru
          _
        // Predicated region
        $region41: #{tpu_custom_call.1} parent=35 // pred_check
          %p340 = pneg %p85
        $region42: #{tpu_custom_call.1} parent=35 // pred_check_branch
          %342 = sbr.rel (%p340) target = $region44
        $region43: #{tpu_custom_call.1} parent=35 // pred_region
          %343 = dma.done [#allocation8], 1024
        $region44: #{tpu_custom_call.1} parent=35 // pred_fallthru
          _
        // Predicated region
        $region45: #{tpu_custom_call.1} parent=35 // pred_check
          %p344 = pneg %p106
        $region46: #{tpu_custom_call.1} parent=35 // pred_check_branch
          %346 = sbr.rel (%p344) target = $region48
        $region47: #{tpu_custom_call.1} parent=35 // pred_region
          %347 = dma.done [#allocation8], 32
        $region48: #{tpu_custom_call.1} parent=35 // pred_fallthru
          _
        %s348 = sand.u32 %s121, 1
        %s349 = scalar_lea.sflag [#allocation11], %s348
        %s350 = sand.u32 %s121, 1
        %s351 = smul.addr %s350, 1024
        %s352 = scalar_lea.vmem [#allocation10], %s351
        // Predicated region
        $region49: #{tpu_custom_call.1} parent=35 // pred_check
          %p353 = pneg %p134
        $region50: #{tpu_custom_call.1} parent=35 // pred_check_branch
          %355 = sbr.rel (%p353) target = $region52
        $region51: #{tpu_custom_call.1} parent=35 // pred_region
          %356 = dma.done %s349, 16384
        $region52: #{tpu_custom_call.1} parent=35 // pred_fallthru
          _
        %s357 = sand.u32 %s51, 1
        %s358 = scalar_lea.sflag [#allocation5], %s357
        %s359 = sand.u32 %s51, 1
        %s360 = smul.addr %s359, 8
        %s361 = scalar_lea.vmem [#allocation4], %s360
        %p362 = pneg %p64
        %p363 = pneg %p61
        %p364 = pneg %p85
        %p365 = pneg %p82
        %p366 = pneg %p106
        %p367 = pneg %p103
        %s368 = sand.u32 %s121, 1
        %s369 = scalar_lea.sflag [#allocation11], %s368
        %s370 = sand.u32 %s121, 1
        %s371 = smul.addr %s370, 1024
        %s372 = scalar_lea.vmem [#allocation10], %s371
        %p373 = pneg %p134
        %p374 = pneg %p131
        %p375 = pneg %p162
        %p376 = pneg %p159
        %s377 = sand.u32 %s149, 1
        %s378 = scalar_lea.sflag [#allocation6], %s377
        %s379 = sand.u32 %s149, 1
        %s380 = smul.addr %s379, 1024
        %s381 = scalar_lea.vmem [#allocation12], %s380
        %p382 = pneg %p188
        %p383 = pneg %p185
        %s384 = sand.u32 %s31, 1
        %s385 = scalar_lea.sflag [#allocation14], %s384
        %s386 = sand.u32 %s175, 1
        %s387 = smul.addr %s386, 8
        %s388 = scalar_lea.vmem [#allocation13], %s387
        %p389 = pneg %p214
        %p390 = pneg %p211
        %s391 = sand.u32 %s31, 1
        %s392 = scalar_lea.sflag [#allocation14], %s391
        %s393 = sand.u32 %s201, 1
        %s394 = smul.addr %s393, 8
        %s395 = scalar_lea.vmem [#allocation15], %s394
        %s396 = smul.u32 8, %s35
        %s397 = smul.u32 16, %s36
        %s398 = smul.u32 8, %s35
        %s399 = smul.u32 16, %s36
        %p400 = scmp.eq.s32.totalorder %s36, 0
        // Predicated region
        $region53: #{tpu_custom_call.1} parent=35 // pred_check
          %p401 = pneg %p400
        $region54: #{tpu_custom_call.1} parent=35 // pred_check_branch
          %403 = sbr.rel (%p401) target = $region56
        $region55: #{tpu_custom_call.1} parent=35 // pred_region
          %v404 = vld [vmem:[%s335] sm:$0xff]
          %v405 = vld [vmem:[#allocation7] sm:$0xff]
          %v406 = vld [vmem:[#allocation7 + $0x8] sm:$0xff]
          %v407 = vld [vmem:[#allocation7 + $0x10] sm:$0xff]
          %v408 = vld [vmem:[#allocation7 + $0x18] sm:$0xff]
          %v409 = vld [vmem:[#allocation7 + $0x20] sm:$0xff]
          %v410 = vld [vmem:[#allocation7 + $0x28] sm:$0xff]
          %v411 = vld [vmem:[#allocation7 + $0x30] sm:$0xff]
          %v412 = vld [vmem:[#allocation7 + $0x38] sm:$0xff]
          %v413 = vld [vmem:[#allocation9] sm:$0x3]
          %v415 = vlaneseq
          %v416 = vshrl.u32 %v415, 7
          %v417 = vsub.s32 0, %v416
          %v418 = vrot.slane %v413, %v417
          %v419 = vlaneseq
          %v420 = vshrl.u32 %v419, 7
          %v421 = vsub.s32 1, %v420
          %v422 = vrot.slane %v413, %v421
          %vm425 = vcmask 261120
          %v427 = vsel %vm425, %v404, 0
          %429 = vmatprep.subr.mxu0 %v406
          %430 = vmatpush1.msra.mxu0 %v405
          %431 = vmatprep.subr.mxu0 %v408
          %432 = vmatpush1.msra.mxu0 %v407
          %433 = vmatprep.subr.mxu0 %v410
          %434 = vmatpush1.msra.mxu0 %v409
          %435 = vmatprep.subr.mxu0 %v412
          %436 = vmatpush1.msra.mxu0 %v411
          %437 = vmatprep.subr.mxu0 0.0
          %438 = vmatpush1.msra.mxu0 0.0
          %439 = vmatprep.subr.mxu0 0.0
          %440 = vmatpush1.msra.mxu0 0.0
          %441 = vmatprep.subr.mxu0 0.0
          %442 = vmatpush1.msra.mxu0 0.0
          %443 = vmatprep.subr.mxu0 0.0
          %444 = vmatpush1.msra.mxu0 0.0
          %445 = vmatprep.subr.mxu0 0.0
          %446 = vmatpush1.msra.mxu0 0.0
          %447 = vmatprep.subr.mxu0 0.0
          %448 = vmatpush1.msra.mxu0 0.0
          %449 = vmatprep.subr.mxu0 0.0
          %450 = vmatpush1.msra.mxu0 0.0
          %451 = vmatprep.subr.mxu0 0.0
          %452 = vmatpush1.msra.mxu0 0.0
          %453 = vmatprep.subr.mxu0 0.0
          %454 = vmatpush1.msra.mxu0 0.0
          %455 = vmatprep.subr.mxu0 0.0
          %456 = vmatpush1.msra.mxu0 0.0
          %457 = vmatprep.subr.mxu0 0.0
          %458 = vmatpush1.msra.mxu0 0.0
          %459 = vmatprep.subr.mxu0 0.0
          %460 = vmatpush1.msra.mxu0 0.0
          %461 = vmatprep.subr.mxu0 0.0
          %462 = vmatpush1.msra.mxu0 0.0
          %463 = vmatprep.subr.mxu0 0.0
          %464 = vmatpush1.msra.mxu0 0.0
          %465 = vmatprep.subr.mxu0 0.0
          %466 = vmatpush1.msra.mxu0 0.0
          %467 = vmatprep.subr.mxu0 0.0
          %468 = vmatpush1.msra.mxu0 0.0
          %469 = vmatprep.subr.mxu0 0.0
          %470 = vmatpush1.msra.mxu0 0.0
          %471 = vmatprep.subr.mxu0 0.0
          %472 = vmatpush1.msra.mxu0 0.0
          %473 = vmatprep.subr.mxu0 0.0
          %474 = vmatpush1.msra.mxu0 0.0
          %475 = vmatprep.subr.mxu0 0.0
          %476 = vmatpush1.msra.mxu0 0.0
          %477 = vmatprep.subr.mxu0 0.0
          %478 = vmatpush1.msra.mxu0 0.0
          %479 = vmatprep.subr.mxu0 0.0
          %480 = vmatpush1.msra.mxu0 0.0
          %481 = vmatprep.subr.mxu0 0.0
          %482 = vmatpush1.msra.mxu0 0.0
          %483 = vmatprep.subr.mxu0 0.0
          %484 = vmatpush1.msra.mxu0 0.0
          %485 = vmatprep.subr.mxu0 0.0
          %486 = vmatpush1.msra.mxu0 0.0
          %487 = vmatprep.subr.mxu0 0.0
          %488 = vmatpush1.msra.mxu0 0.0
          %489 = vmatprep.subr.mxu0 0.0
          %490 = vmatpush1.msra.mxu0 0.0
          %491 = vmatprep.subr.mxu0 0.0
          %492 = vmatpush1.msra.mxu0 0.0
          %493 = vmatprep.mubr.f32.mxu0 0.0
          %494 = vmatmul.mubr.f32.gmra.mrb[0].mxu0 %v427
          %v495 = vpop.f32.mrb[0].mxu0
          %v496 = vadd.f32 %v418, %v495
          %v497 = vpop.f32.mrb[0].mxu0
          %v498 = vadd.f32 %v422, %v497
          %499 = vdwg.mxu0
          %500 = vst [vmem:[#allocation2] sm:$0xff] %v496
          %v501 = vmul.f32 %v498, 0.5
          %v502 = vmul.f32 %v501, 1.442695
          %v503 = vpow.pop %v502
          %504 = vst [vmem:[#allocation3] sm:$0xff] %v503
          %505 = vst [vmem:[%s388] sm:$0xff] %v496
          %506 = vst [vmem:[%s395] sm:$0xff] %v498
        $region56: #{tpu_custom_call.1} parent=35 // pred_fallthru
          _
        %v507 = vld [vmem:[#allocation2] sm:$0xff]
        %v509 = vcombine.high %v507, %v507
        %v511 = vunpack.c.l.s4 1966171168
        %v512 = vunpack.c.0.s8 %v511
        %v513 = vlaneseq
        %v514 = vshrl.u32 %v513, 7
        %v515 = vsub.s32 %v512, %v514
        %v516 = vrot.slane %v507, %v515
        %v518 = vunpack.c.l.s4 1966171168
        %v519 = vunpack.c.0.s8 %v518
        %v520 = vlaneseq
        %v521 = vshrl.u32 %v520, 7
        %v522 = vsub.s32 %v519, %v521
        %v523 = vrot.slane %v509, %v522
        %v524 = vcombine.high %v516, %v516
        %v525 = vcombine.high %v523, %v523
        %v527 = vunpack.c.l.s4 1966171168
        %v528 = vunpack.c.0.s8 %v527
        %v529 = vlaneseq
        %v530 = vshrl.u32 %v529, 7
        %v531 = vsub.s32 %v528, %v530
        %v532 = vrot.slane %v516, %v531
        %v534 = vunpack.c.l.s4 1966171168
        %v535 = vunpack.c.0.s8 %v534
        %v536 = vlaneseq
        %v537 = vshrl.u32 %v536, 7
        %v538 = vsub.s32 %v535, %v537
        %v539 = vrot.slane %v523, %v538
        %v541 = vunpack.c.l.s4 1966171168
        %v542 = vunpack.c.0.s8 %v541
        %v543 = vlaneseq
        %v544 = vshrl.u32 %v543, 7
        %v545 = vsub.s32 %v542, %v544
        %v546 = vrot.slane %v524, %v545
        %v548 = vunpack.c.l.s4 1966171168
        %v549 = vunpack.c.0.s8 %v548
        %v550 = vlaneseq
        %v551 = vshrl.u32 %v550, 7
        %v552 = vsub.s32 %v549, %v551
        %v553 = vrot.slane %v525, %v552
        %v554 = vcombine.high %v532, %v532
        %v555 = vcombine.high %v539, %v539
        %v556 = vcombine.high %v546, %v546
        %v557 = vcombine.high %v553, %v553
        %v558 = vld [vmem:[#allocation3] sm:$0xff]
        %v560 = vcombine.high %v558, %v558
        %v562 = vunpack.c.l.s4 1966171168
        %v563 = vunpack.c.0.s8 %v562
        %v564 = vlaneseq
        %v565 = vshrl.u32 %v564, 7
        %v566 = vsub.s32 %v563, %v565
        %v567 = vrot.slane %v558, %v566
        %v569 = vunpack.c.l.s4 1966171168
        %v570 = vunpack.c.0.s8 %v569
        %v571 = vlaneseq
        %v572 = vshrl.u32 %v571, 7
        %v573 = vsub.s32 %v570, %v572
        %v574 = vrot.slane %v560, %v573
        %v575 = vcombine.high %v567, %v567
        %v576 = vcombine.high %v574, %v574
        %v578 = vunpack.c.l.s4 1966171168
        %v579 = vunpack.c.0.s8 %v578
        %v580 = vlaneseq
        %v581 = vshrl.u32 %v580, 7
        %v582 = vsub.s32 %v579, %v581
        %v583 = vrot.slane %v567, %v582
        %v585 = vunpack.c.l.s4 1966171168
        %v586 = vunpack.c.0.s8 %v585
        %v587 = vlaneseq
        %v588 = vshrl.u32 %v587, 7
        %v589 = vsub.s32 %v586, %v588
        %v590 = vrot.slane %v574, %v589
        %v592 = vunpack.c.l.s4 1966171168
        %v593 = vunpack.c.0.s8 %v592
        %v594 = vlaneseq
        %v595 = vshrl.u32 %v594, 7
        %v596 = vsub.s32 %v593, %v595
        %v597 = vrot.slane %v575, %v596
        %v599 = vunpack.c.l.s4 1966171168
        %v600 = vunpack.c.0.s8 %v599
        %v601 = vlaneseq
        %v602 = vshrl.u32 %v601, 7
        %v603 = vsub.s32 %v600, %v602
        %v604 = vrot.slane %v576, %v603
        %v605 = vcombine.high %v583, %v583
        %v606 = vcombine.high %v590, %v590
        %v607 = vcombine.high %v597, %v597
        %v608 = vcombine.high %v604, %v604
        %v609 = vld [vmem:[%s352] sm:$0xff]
        %v610 = vld [vmem:[%s352 + $0x8] sm:$0xff]
        %v611 = vld [vmem:[%s352 + $0x10] sm:$0xff]
        %v612 = vld [vmem:[%s352 + $0x18] sm:$0xff]
        %v613 = vld [vmem:[%s352 + $0x20] sm:$0xff]
        %v614 = vld [vmem:[%s352 + $0x28] sm:$0xff]
        %v615 = vld [vmem:[%s352 + $0x30] sm:$0xff]
        %v616 = vld [vmem:[%s352 + $0x38] sm:$0xff]
        %v617 = vld [vmem:[%s352 + $0x40] sm:$0xff]
        %v618 = vld [vmem:[%s352 + $0x48] sm:$0xff]
        %v619 = vld [vmem:[%s352 + $0x50] sm:$0xff]
        %v620 = vld [vmem:[%s352 + $0x58] sm:$0xff]
        %v621 = vld [vmem:[%s352 + $0x60] sm:$0xff]
        %v622 = vld [vmem:[%s352 + $0x68] sm:$0xff]
        %v623 = vld [vmem:[%s352 + $0x70] sm:$0xff]
        %v624 = vld [vmem:[%s352 + $0x78] sm:$0xff]
        %v625 = vld [vmem:[%s352 + $0x80] sm:$0xff]
        %v626 = vld [vmem:[%s352 + $0x88] sm:$0xff]
        %v627 = vld [vmem:[%s352 + $0x90] sm:$0xff]
        %v628 = vld [vmem:[%s352 + $0x98] sm:$0xff]
        %v629 = vld [vmem:[%s352 + $0xa0] sm:$0xff]
        %v630 = vld [vmem:[%s352 + $0xa8] sm:$0xff]
        %v631 = vld [vmem:[%s352 + $0xb0] sm:$0xff]
        %v632 = vld [vmem:[%s352 + $0xb8] sm:$0xff]
        %v633 = vld [vmem:[%s352 + $0xc0] sm:$0xff]
        %v634 = vld [vmem:[%s352 + $0xc8] sm:$0xff]
        %v635 = vld [vmem:[%s352 + $0xd0] sm:$0xff]
        %v636 = vld [vmem:[%s352 + $0xd8] sm:$0xff]
        %v637 = vld [vmem:[%s352 + $0xe0] sm:$0xff]
        %v638 = vld [vmem:[%s352 + $0xe8] sm:$0xff]
        %v639 = vld [vmem:[%s352 + $0xf0] sm:$0xff]
        %v640 = vld [vmem:[%s352 + $0xf8] sm:$0xff]
        %v641 = vld [vmem:[%s352 + $0x100] sm:$0xff]
        %v642 = vld [vmem:[%s352 + $0x108] sm:$0xff]
        %v643 = vld [vmem:[%s352 + $0x110] sm:$0xff]
        %v644 = vld [vmem:[%s352 + $0x118] sm:$0xff]
        %v645 = vld [vmem:[%s352 + $0x120] sm:$0xff]
        %v646 = vld [vmem:[%s352 + $0x128] sm:$0xff]
        %v647 = vld [vmem:[%s352 + $0x130] sm:$0xff]
        %v648 = vld [vmem:[%s352 + $0x138] sm:$0xff]
        %v649 = vld [vmem:[%s352 + $0x140] sm:$0xff]
        %v650 = vld [vmem:[%s352 + $0x148] sm:$0xff]
        %v651 = vld [vmem:[%s352 + $0x150] sm:$0xff]
        %v652 = vld [vmem:[%s352 + $0x158] sm:$0xff]
        %v653 = vld [vmem:[%s352 + $0x160] sm:$0xff]
        %v654 = vld [vmem:[%s352 + $0x168] sm:$0xff]
        %v655 = vld [vmem:[%s352 + $0x170] sm:$0xff]
        %v656 = vld [vmem:[%s352 + $0x178] sm:$0xff]
        %v657 = vld [vmem:[%s352 + $0x180] sm:$0xff]
        %v658 = vld [vmem:[%s352 + $0x188] sm:$0xff]
        %v659 = vld [vmem:[%s352 + $0x190] sm:$0xff]
        %v660 = vld [vmem:[%s352 + $0x198] sm:$0xff]
        %v661 = vld [vmem:[%s352 + $0x1a0] sm:$0xff]
        %v662 = vld [vmem:[%s352 + $0x1a8] sm:$0xff]
        %v663 = vld [vmem:[%s352 + $0x1b0] sm:$0xff]
        %v664 = vld [vmem:[%s352 + $0x1b8] sm:$0xff]
        %v665 = vld [vmem:[%s352 + $0x1c0] sm:$0xff]
        %v666 = vld [vmem:[%s352 + $0x1c8] sm:$0xff]
        %v667 = vld [vmem:[%s352 + $0x1d0] sm:$0xff]
        %v668 = vld [vmem:[%s352 + $0x1d8] sm:$0xff]
        %v669 = vld [vmem:[%s352 + $0x1e0] sm:$0xff]
        %v670 = vld [vmem:[%s352 + $0x1e8] sm:$0xff]
        %v671 = vld [vmem:[%s352 + $0x1f0] sm:$0xff]
        %v672 = vld [vmem:[%s352 + $0x1f8] sm:$0xff]
        %v673 = vld [vmem:[%s352 + $0x200] sm:$0xff]
        %v674 = vld [vmem:[%s352 + $0x208] sm:$0xff]
        %v675 = vld [vmem:[%s352 + $0x210] sm:$0xff]
        %v676 = vld [vmem:[%s352 + $0x218] sm:$0xff]
        %v677 = vld [vmem:[%s352 + $0x220] sm:$0xff]
        %v678 = vld [vmem:[%s352 + $0x228] sm:$0xff]
        %v679 = vld [vmem:[%s352 + $0x230] sm:$0xff]
        %v680 = vld [vmem:[%s352 + $0x238] sm:$0xff]
        %v681 = vld [vmem:[%s352 + $0x240] sm:$0xff]
        %v682 = vld [vmem:[%s352 + $0x248] sm:$0xff]
        %v683 = vld [vmem:[%s352 + $0x250] sm:$0xff]
        %v684 = vld [vmem:[%s352 + $0x258] sm:$0xff]
        %v685 = vld [vmem:[%s352 + $0x260] sm:$0xff]
        %v686 = vld [vmem:[%s352 + $0x268] sm:$0xff]
        %v687 = vld [vmem:[%s352 + $0x270] sm:$0xff]
        %v688 = vld [vmem:[%s352 + $0x278] sm:$0xff]
        %v689 = vld [vmem:[%s352 + $0x280] sm:$0xff]
        %v690 = vld [vmem:[%s352 + $0x288] sm:$0xff]
        %v691 = vld [vmem:[%s352 + $0x290] sm:$0xff]
        %v692 = vld [vmem:[%s352 + $0x298] sm:$0xff]
        %v693 = vld [vmem:[%s352 + $0x2a0] sm:$0xff]
        %v694 = vld [vmem:[%s352 + $0x2a8] sm:$0xff]
        %v695 = vld [vmem:[%s352 + $0x2b0] sm:$0xff]
        %v696 = vld [vmem:[%s352 + $0x2b8] sm:$0xff]
        %v697 = vld [vmem:[%s352 + $0x2c0] sm:$0xff]
        %v698 = vld [vmem:[%s352 + $0x2c8] sm:$0xff]
        %v699 = vld [vmem:[%s352 + $0x2d0] sm:$0xff]
        %v700 = vld [vmem:[%s352 + $0x2d8] sm:$0xff]
        %v701 = vld [vmem:[%s352 + $0x2e0] sm:$0xff]
        %v702 = vld [vmem:[%s352 + $0x2e8] sm:$0xff]
        %v703 = vld [vmem:[%s352 + $0x2f0] sm:$0xff]
        %v704 = vld [vmem:[%s352 + $0x2f8] sm:$0xff]
        %v705 = vld [vmem:[%s352 + $0x300] sm:$0xff]
        %v706 = vld [vmem:[%s352 + $0x308] sm:$0xff]
        %v707 = vld [vmem:[%s352 + $0x310] sm:$0xff]
        %v708 = vld [vmem:[%s352 + $0x318] sm:$0xff]
        %v709 = vld [vmem:[%s352 + $0x320] sm:$0xff]
        %v710 = vld [vmem:[%s352 + $0x328] sm:$0xff]
        %v711 = vld [vmem:[%s352 + $0x330] sm:$0xff]
        %v712 = vld [vmem:[%s352 + $0x338] sm:$0xff]
        %v713 = vld [vmem:[%s352 + $0x340] sm:$0xff]
        %v714 = vld [vmem:[%s352 + $0x348] sm:$0xff]
        %v715 = vld [vmem:[%s352 + $0x350] sm:$0xff]
        %v716 = vld [vmem:[%s352 + $0x358] sm:$0xff]
        %v717 = vld [vmem:[%s352 + $0x360] sm:$0xff]
        %v718 = vld [vmem:[%s352 + $0x368] sm:$0xff]
        %v719 = vld [vmem:[%s352 + $0x370] sm:$0xff]
        %v720 = vld [vmem:[%s352 + $0x378] sm:$0xff]
        %v721 = vld [vmem:[%s352 + $0x380] sm:$0xff]
        %v722 = vld [vmem:[%s352 + $0x388] sm:$0xff]
        %v723 = vld [vmem:[%s352 + $0x390] sm:$0xff]
        %v724 = vld [vmem:[%s352 + $0x398] sm:$0xff]
        %v725 = vld [vmem:[%s352 + $0x3a0] sm:$0xff]
        %v726 = vld [vmem:[%s352 + $0x3a8] sm:$0xff]
        %v727 = vld [vmem:[%s352 + $0x3b0] sm:$0xff]
        %v728 = vld [vmem:[%s352 + $0x3b8] sm:$0xff]
        %v729 = vld [vmem:[%s352 + $0x3c0] sm:$0xff]
        %v730 = vld [vmem:[%s352 + $0x3c8] sm:$0xff]
        %v731 = vld [vmem:[%s352 + $0x3d0] sm:$0xff]
        %v732 = vld [vmem:[%s352 + $0x3d8] sm:$0xff]
        %v733 = vld [vmem:[%s352 + $0x3e0] sm:$0xff]
        %v734 = vld [vmem:[%s352 + $0x3e8] sm:$0xff]
        %v735 = vld [vmem:[%s352 + $0x3f0] sm:$0xff]
        %v736 = vld [vmem:[%s352 + $0x3f8] sm:$0xff]
        %v737 = vlaneseq
        %v738 = vshrl.u32 %v737, 7
        %v739 = vsub.s32 0, %v738
        %v740 = vrot.slane %v583, %v739
        %v741 = vlaneseq
        %v742 = vshrl.u32 %v741, 7
        %v743 = vsub.s32 0, %v742
        %v744 = vrot.slane %v597, %v743
        %v745 = vlaneseq
        %v746 = vshrl.u32 %v745, 7
        %v747 = vsub.s32 0, %v746
        %v748 = vrot.slane %v605, %v747
        %v749 = vlaneseq
        %v750 = vshrl.u32 %v749, 7
        %v751 = vsub.s32 0, %v750
        %v752 = vrot.slane %v607, %v751
        %v753 = vlaneseq
        %v754 = vshrl.u32 %v753, 7
        %v755 = vsub.s32 0, %v754
        %v756 = vrot.slane %v590, %v755
        %v757 = vlaneseq
        %v758 = vshrl.u32 %v757, 7
        %v759 = vsub.s32 0, %v758
        %v760 = vrot.slane %v604, %v759
        %v761 = vlaneseq
        %v762 = vshrl.u32 %v761, 7
        %v763 = vsub.s32 0, %v762
        %v764 = vrot.slane %v606, %v763
        %v765 = vlaneseq
        %v766 = vshrl.u32 %v765, 7
        %v767 = vsub.s32 0, %v766
        %v768 = vrot.slane %v608, %v767
        %v777 = vmul.f32 %v740, %v609
        %v778 = vmul.f32 %v740, %v610
        %v779 = vmul.f32 %v740, %v611
        %v780 = vmul.f32 %v740, %v612
        %v781 = vmul.f32 %v740, %v613
        %v782 = vmul.f32 %v740, %v614
        %v783 = vmul.f32 %v740, %v615
        %v784 = vmul.f32 %v740, %v616
        %v785 = vmul.f32 %v740, %v617
        %v786 = vmul.f32 %v740, %v618
        %v787 = vmul.f32 %v740, %v619
        %v788 = vmul.f32 %v740, %v620
        %v789 = vmul.f32 %v740, %v621
        %v790 = vmul.f32 %v740, %v622
        %v791 = vmul.f32 %v740, %v623
        %v792 = vmul.f32 %v740, %v624
        %v793 = vmul.f32 %v744, %v625
        %v794 = vmul.f32 %v744, %v626
        %v795 = vmul.f32 %v744, %v627
        %v796 = vmul.f32 %v744, %v628
        %v797 = vmul.f32 %v744, %v629
        %v798 = vmul.f32 %v744, %v630
        %v799 = vmul.f32 %v744, %v631
        %v800 = vmul.f32 %v744, %v632
        %v801 = vmul.f32 %v744, %v633
        %v802 = vmul.f32 %v744, %v634
        %v803 = vmul.f32 %v744, %v635
        %v804 = vmul.f32 %v744, %v636
        %v805 = vmul.f32 %v744, %v637
        %v806 = vmul.f32 %v744, %v638
        %v807 = vmul.f32 %v744, %v639
        %v808 = vmul.f32 %v744, %v640
        %v809 = vmul.f32 %v748, %v641
        %v810 = vmul.f32 %v748, %v642
        %v811 = vmul.f32 %v748, %v643
        %v812 = vmul.f32 %v748, %v644
        %v813 = vmul.f32 %v748, %v645
        %v814 = vmul.f32 %v748, %v646
        %v815 = vmul.f32 %v748, %v647
        %v816 = vmul.f32 %v748, %v648
        %v817 = vmul.f32 %v748, %v649
        %v818 = vmul.f32 %v748, %v650
        %v819 = vmul.f32 %v748, %v651
        %v820 = vmul.f32 %v748, %v652
        %v821 = vmul.f32 %v748, %v653
        %v822 = vmul.f32 %v748, %v654
        %v823 = vmul.f32 %v748, %v655
        %v824 = vmul.f32 %v748, %v656
        %v825 = vmul.f32 %v752, %v657
        %v826 = vmul.f32 %v752, %v658
        %v827 = vmul.f32 %v752, %v659
        %v828 = vmul.f32 %v752, %v660
        %v829 = vmul.f32 %v752, %v661
        %v830 = vmul.f32 %v752, %v662
        %v831 = vmul.f32 %v752, %v663
        %v832 = vmul.f32 %v752, %v664
        %v833 = vmul.f32 %v752, %v665
        %v834 = vmul.f32 %v752, %v666
        %v835 = vmul.f32 %v752, %v667
        %v836 = vmul.f32 %v752, %v668
        %v837 = vmul.f32 %v752, %v669
        %v838 = vmul.f32 %v752, %v670
        %v839 = vmul.f32 %v752, %v671
        %v840 = vmul.f32 %v752, %v672
        %v841 = vmul.f32 %v756, %v673
        %v842 = vmul.f32 %v756, %v674
        %v843 = vmul.f32 %v756, %v675
        %v844 = vmul.f32 %v756, %v676
        %v845 = vmul.f32 %v756, %v677
        %v846 = vmul.f32 %v756, %v678
        %v847 = vmul.f32 %v756, %v679
        %v848 = vmul.f32 %v756, %v680
        %v849 = vmul.f32 %v756, %v681
        %v850 = vmul.f32 %v756, %v682
        %v851 = vmul.f32 %v756, %v683
        %v852 = vmul.f32 %v756, %v684
        %v853 = vmul.f32 %v756, %v685
        %v854 = vmul.f32 %v756, %v686
        %v855 = vmul.f32 %v756, %v687
        %v856 = vmul.f32 %v756, %v688
        %v857 = vmul.f32 %v760, %v689
        %v858 = vmul.f32 %v760, %v690
        %v859 = vmul.f32 %v760, %v691
        %v860 = vmul.f32 %v760, %v692
        %v861 = vmul.f32 %v760, %v693
        %v862 = vmul.f32 %v760, %v694
        %v863 = vmul.f32 %v760, %v695
        %v864 = vmul.f32 %v760, %v696
        %v865 = vmul.f32 %v760, %v697
        %v866 = vmul.f32 %v760, %v698
        %v867 = vmul.f32 %v760, %v699
        %v868 = vmul.f32 %v760, %v700
        %v869 = vmul.f32 %v760, %v701
        %v870 = vmul.f32 %v760, %v702
        %v871 = vmul.f32 %v760, %v703
        %v872 = vmul.f32 %v760, %v704
        %v873 = vmul.f32 %v764, %v705
        %v874 = vmul.f32 %v764, %v706
        %v875 = vmul.f32 %v764, %v707
        %v876 = vmul.f32 %v764, %v708
        %v877 = vmul.f32 %v764, %v709
        %v878 = vmul.f32 %v764, %v710
        %v879 = vmul.f32 %v764, %v711
        %v880 = vmul.f32 %v764, %v712
        %v881 = vmul.f32 %v764, %v713
        %v882 = vmul.f32 %v764, %v714
        %v883 = vmul.f32 %v764, %v715
        %v884 = vmul.f32 %v764, %v716
        %v885 = vmul.f32 %v764, %v717
        %v886 = vmul.f32 %v764, %v718
        %v887 = vmul.f32 %v764, %v719
        %v888 = vmul.f32 %v764, %v720
        %v889 = vmul.f32 %v768, %v721
        %v890 = vmul.f32 %v768, %v722
        %v891 = vmul.f32 %v768, %v723
        %v892 = vmul.f32 %v768, %v724
        %v893 = vmul.f32 %v768, %v725
        %v894 = vmul.f32 %v768, %v726
        %v895 = vmul.f32 %v768, %v727
        %v896 = vmul.f32 %v768, %v728
        %v897 = vmul.f32 %v768, %v729
        %v898 = vmul.f32 %v768, %v730
        %v899 = vmul.f32 %v768, %v731
        %v900 = vmul.f32 %v768, %v732
        %v901 = vmul.f32 %v768, %v733
        %v902 = vmul.f32 %v768, %v734
        %v903 = vmul.f32 %v768, %v735
        %v904 = vmul.f32 %v768, %v736
        %v905 = vlaneseq
        %v906 = vshrl.u32 %v905, 7
        %v907 = vsub.s32 0, %v906
        %v908 = vrot.slane %v532, %v907
        %v909 = vlaneseq
        %v910 = vshrl.u32 %v909, 7
        %v911 = vsub.s32 0, %v910
        %v912 = vrot.slane %v546, %v911
        %v913 = vlaneseq
        %v914 = vshrl.u32 %v913, 7
        %v915 = vsub.s32 0, %v914
        %v916 = vrot.slane %v554, %v915
        %v917 = vlaneseq
        %v918 = vshrl.u32 %v917, 7
        %v919 = vsub.s32 0, %v918
        %v920 = vrot.slane %v556, %v919
        %v921 = vlaneseq
        %v922 = vshrl.u32 %v921, 7
        %v923 = vsub.s32 0, %v922
        %v924 = vrot.slane %v539, %v923
        %v925 = vlaneseq
        %v926 = vshrl.u32 %v925, 7
        %v927 = vsub.s32 0, %v926
        %v928 = vrot.slane %v553, %v927
        %v929 = vlaneseq
        %v930 = vshrl.u32 %v929, 7
        %v931 = vsub.s32 0, %v930
        %v932 = vrot.slane %v555, %v931
        %v933 = vlaneseq
        %v934 = vshrl.u32 %v933, 7
        %v935 = vsub.s32 0, %v934
        %v936 = vrot.slane %v557, %v935
        %v945 = vadd.f32 %v908, %v777
        %v946 = vadd.f32 %v908, %v778
        %v947 = vadd.f32 %v908, %v779
        %v948 = vadd.f32 %v908, %v780
        %v949 = vadd.f32 %v908, %v781
        %v950 = vadd.f32 %v908, %v782
        %v951 = vadd.f32 %v908, %v783
        %v952 = vadd.f32 %v908, %v784
        %v953 = vadd.f32 %v908, %v785
        %v954 = vadd.f32 %v908, %v786
        %v955 = vadd.f32 %v908, %v787
        %v956 = vadd.f32 %v908, %v788
        %v957 = vadd.f32 %v908, %v789
        %v958 = vadd.f32 %v908, %v790
        %v959 = vadd.f32 %v908, %v791
        %v960 = vadd.f32 %v908, %v792
        %v961 = vadd.f32 %v912, %v793
        %v962 = vadd.f32 %v912, %v794
        %v963 = vadd.f32 %v912, %v795
        %v964 = vadd.f32 %v912, %v796
        %v965 = vadd.f32 %v912, %v797
        %v966 = vadd.f32 %v912, %v798
        %v967 = vadd.f32 %v912, %v799
        %v968 = vadd.f32 %v912, %v800
        %v969 = vadd.f32 %v912, %v801
        %v970 = vadd.f32 %v912, %v802
        %v971 = vadd.f32 %v912, %v803
        %v972 = vadd.f32 %v912, %v804
        %v973 = vadd.f32 %v912, %v805
        %v974 = vadd.f32 %v912, %v806
        %v975 = vadd.f32 %v912, %v807
        %v976 = vadd.f32 %v912, %v808
        %v977 = vadd.f32 %v916, %v809
        %v978 = vadd.f32 %v916, %v810
        %v979 = vadd.f32 %v916, %v811
        %v980 = vadd.f32 %v916, %v812
        %v981 = vadd.f32 %v916, %v813
        %v982 = vadd.f32 %v916, %v814
        %v983 = vadd.f32 %v916, %v815
        %v984 = vadd.f32 %v916, %v816
        %v985 = vadd.f32 %v916, %v817
        %v986 = vadd.f32 %v916, %v818
        %v987 = vadd.f32 %v916, %v819
        %v988 = vadd.f32 %v916, %v820
        %v989 = vadd.f32 %v916, %v821
        %v990 = vadd.f32 %v916, %v822
        %v991 = vadd.f32 %v916, %v823
        %v992 = vadd.f32 %v916, %v824
        %v993 = vadd.f32 %v920, %v825
        %v994 = vadd.f32 %v920, %v826
        %v995 = vadd.f32 %v920, %v827
        %v996 = vadd.f32 %v920, %v828
        %v997 = vadd.f32 %v920, %v829
        %v998 = vadd.f32 %v920, %v830
        %v999 = vadd.f32 %v920, %v831
        %v1000 = vadd.f32 %v920, %v832
        %v1001 = vadd.f32 %v920, %v833
        %v1002 = vadd.f32 %v920, %v834
        %v1003 = vadd.f32 %v920, %v835
        %v1004 = vadd.f32 %v920, %v836
        %v1005 = vadd.f32 %v920, %v837
        %v1006 = vadd.f32 %v920, %v838
        %v1007 = vadd.f32 %v920, %v839
        %v1008 = vadd.f32 %v920, %v840
        %v1009 = vadd.f32 %v924, %v841
        %v1010 = vadd.f32 %v924, %v842
        %v1011 = vadd.f32 %v924, %v843
        %v1012 = vadd.f32 %v924, %v844
        %v1013 = vadd.f32 %v924, %v845
        %v1014 = vadd.f32 %v924, %v846
        %v1015 = vadd.f32 %v924, %v847
        %v1016 = vadd.f32 %v924, %v848
        %v1017 = vadd.f32 %v924, %v849
        %v1018 = vadd.f32 %v924, %v850
        %v1019 = vadd.f32 %v924, %v851
        %v1020 = vadd.f32 %v924, %v852
        %v1021 = vadd.f32 %v924, %v853
        %v1022 = vadd.f32 %v924, %v854
        %v1023 = vadd.f32 %v924, %v855
        %v1024 = vadd.f32 %v924, %v856
        %v1025 = vadd.f32 %v928, %v857
        %v1026 = vadd.f32 %v928, %v858
        %v1027 = vadd.f32 %v928, %v859
        %v1028 = vadd.f32 %v928, %v860
        %v1029 = vadd.f32 %v928, %v861
        %v1030 = vadd.f32 %v928, %v862
        %v1031 = vadd.f32 %v928, %v863
        %v1032 = vadd.f32 %v928, %v864
        %v1033 = vadd.f32 %v928, %v865
        %v1034 = vadd.f32 %v928, %v866
        %v1035 = vadd.f32 %v928, %v867
        %v1036 = vadd.f32 %v928, %v868
        %v1037 = vadd.f32 %v928, %v869
        %v1038 = vadd.f32 %v928, %v870
        %v1039 = vadd.f32 %v928, %v871
        %v1040 = vadd.f32 %v928, %v872
        %v1041 = vadd.f32 %v932, %v873
        %v1042 = vadd.f32 %v932, %v874
        %v1043 = vadd.f32 %v932, %v875
        %v1044 = vadd.f32 %v932, %v876
        %v1045 = vadd.f32 %v932, %v877
        %v1046 = vadd.f32 %v932, %v878
        %v1047 = vadd.f32 %v932, %v879
        %v1048 = vadd.f32 %v932, %v880
        %v1049 = vadd.f32 %v932, %v881
        %v1050 = vadd.f32 %v932, %v882
        %v1051 = vadd.f32 %v932, %v883
        %v1052 = vadd.f32 %v932, %v884
        %v1053 = vadd.f32 %v932, %v885
        %v1054 = vadd.f32 %v932, %v886
        %v1055 = vadd.f32 %v932, %v887
        %v1056 = vadd.f32 %v932, %v888
        %v1057 = vadd.f32 %v936, %v889
        %v1058 = vadd.f32 %v936, %v890
        %v1059 = vadd.f32 %v936, %v891
        %v1060 = vadd.f32 %v936, %v892
        %v1061 = vadd.f32 %v936, %v893
        %v1062 = vadd.f32 %v936, %v894
        %v1063 = vadd.f32 %v936, %v895
        %v1064 = vadd.f32 %v936, %v896
        %v1065 = vadd.f32 %v936, %v897
        %v1066 = vadd.f32 %v936, %v898
        %v1067 = vadd.f32 %v936, %v899
        %v1068 = vadd.f32 %v936, %v900
        %v1069 = vadd.f32 %v936, %v901
        %v1070 = vadd.f32 %v936, %v902
        %v1071 = vadd.f32 %v936, %v903
        %v1072 = vadd.f32 %v936, %v904
        %1073 = vst [vmem:[%s381] sm:$0xff] %v945
        %1074 = vst [vmem:[%s381 + $0x8] sm:$0xff] %v946
        %1075 = vst [vmem:[%s381 + $0x10] sm:$0xff] %v947
        %1076 = vst [vmem:[%s381 + $0x18] sm:$0xff] %v948
        %1077 = vst [vmem:[%s381 + $0x20] sm:$0xff] %v949
        %1078 = vst [vmem:[%s381 + $0x28] sm:$0xff] %v950
        %1079 = vst [vmem:[%s381 + $0x30] sm:$0xff] %v951
        %1080 = vst [vmem:[%s381 + $0x38] sm:$0xff] %v952
        %1081 = vst [vmem:[%s381 + $0x40] sm:$0xff] %v953
        %1082 = vst [vmem:[%s381 + $0x48] sm:$0xff] %v954
        %1083 = vst [vmem:[%s381 + $0x50] sm:$0xff] %v955
        %1084 = vst [vmem:[%s381 + $0x58] sm:$0xff] %v956
        %1085 = vst [vmem:[%s381 + $0x60] sm:$0xff] %v957
        %1086 = vst [vmem:[%s381 + $0x68] sm:$0xff] %v958
        %1087 = vst [vmem:[%s381 + $0x70] sm:$0xff] %v959
        %1088 = vst [vmem:[%s381 + $0x78] sm:$0xff] %v960
        %1089 = vst [vmem:[%s381 + $0x80] sm:$0xff] %v961
        %1090 = vst [vmem:[%s381 + $0x88] sm:$0xff] %v962
        %1091 = vst [vmem:[%s381 + $0x90] sm:$0xff] %v963
        %1092 = vst [vmem:[%s381 + $0x98] sm:$0xff] %v964
        %1093 = vst [vmem:[%s381 + $0xa0] sm:$0xff] %v965
        %1094 = vst [vmem:[%s381 + $0xa8] sm:$0xff] %v966
        %1095 = vst [vmem:[%s381 + $0xb0] sm:$0xff] %v967
        %1096 = vst [vmem:[%s381 + $0xb8] sm:$0xff] %v968
        %1097 = vst [vmem:[%s381 + $0xc0] sm:$0xff] %v969
        %1098 = vst [vmem:[%s381 + $0xc8] sm:$0xff] %v970
        %1099 = vst [vmem:[%s381 + $0xd0] sm:$0xff] %v971
        %1100 = vst [vmem:[%s381 + $0xd8] sm:$0xff] %v972
        %1101 = vst [vmem:[%s381 + $0xe0] sm:$0xff] %v973
        %1102 = vst [vmem:[%s381 + $0xe8] sm:$0xff] %v974
        %1103 = vst [vmem:[%s381 + $0xf0] sm:$0xff] %v975
        %1104 = vst [vmem:[%s381 + $0xf8] sm:$0xff] %v976
        %1105 = vst [vmem:[%s381 + $0x100] sm:$0xff] %v977
        %1106 = vst [vmem:[%s381 + $0x108] sm:$0xff] %v978
        %1107 = vst [vmem:[%s381 + $0x110] sm:$0xff] %v979
        %1108 = vst [vmem:[%s381 + $0x118] sm:$0xff] %v980
        %1109 = vst [vmem:[%s381 + $0x120] sm:$0xff] %v981
        %1110 = vst [vmem:[%s381 + $0x128] sm:$0xff] %v982
        %1111 = vst [vmem:[%s381 + $0x130] sm:$0xff] %v983
        %1112 = vst [vmem:[%s381 + $0x138] sm:$0xff] %v984
        %1113 = vst [vmem:[%s381 + $0x140] sm:$0xff] %v985
        %1114 = vst [vmem:[%s381 + $0x148] sm:$0xff] %v986
        %1115 = vst [vmem:[%s381 + $0x150] sm:$0xff] %v987
        %1116 = vst [vmem:[%s381 + $0x158] sm:$0xff] %v988
        %1117 = vst [vmem:[%s381 + $0x160] sm:$0xff] %v989
        %1118 = vst [vmem:[%s381 + $0x168] sm:$0xff] %v990
        %1119 = vst [vmem:[%s381 + $0x170] sm:$0xff] %v991
        %1120 = vst [vmem:[%s381 + $0x178] sm:$0xff] %v992
        %1121 = vst [vmem:[%s381 + $0x180] sm:$0xff] %v993
        %1122 = vst [vmem:[%s381 + $0x188] sm:$0xff] %v994
        %1123 = vst [vmem:[%s381 + $0x190] sm:$0xff] %v995
        %1124 = vst [vmem:[%s381 + $0x198] sm:$0xff] %v996
        %1125 = vst [vmem:[%s381 + $0x1a0] sm:$0xff] %v997
        %1126 = vst [vmem:[%s381 + $0x1a8] sm:$0xff] %v998
        %1127 = vst [vmem:[%s381 + $0x1b0] sm:$0xff] %v999
        %1128 = vst [vmem:[%s381 + $0x1b8] sm:$0xff] %v1000
        %1129 = vst [vmem:[%s381 + $0x1c0] sm:$0xff] %v1001
        %1130 = vst [vmem:[%s381 + $0x1c8] sm:$0xff] %v1002
        %1131 = vst [vmem:[%s381 + $0x1d0] sm:$0xff] %v1003
        %1132 = vst [vmem:[%s381 + $0x1d8] sm:$0xff] %v1004
        %1133 = vst [vmem:[%s381 + $0x1e0] sm:$0xff] %v1005
        %1134 = vst [vmem:[%s381 + $0x1e8] sm:$0xff] %v1006
        %1135 = vst [vmem:[%s381 + $0x1f0] sm:$0xff] %v1007
        %1136 = vst [vmem:[%s381 + $0x1f8] sm:$0xff] %v1008
        %1137 = vst [vmem:[%s381 + $0x200] sm:$0xff] %v1009
        %1138 = vst [vmem:[%s381 + $0x208] sm:$0xff] %v1010
        %1139 = vst [vmem:[%s381 + $0x210] sm:$0xff] %v1011
        %1140 = vst [vmem:[%s381 + $0x218] sm:$0xff] %v1012
        %1141 = vst [vmem:[%s381 + $0x220] sm:$0xff] %v1013
        %1142 = vst [vmem:[%s381 + $0x228] sm:$0xff] %v1014
        %1143 = vst [vmem:[%s381 + $0x230] sm:$0xff] %v1015
        %1144 = vst [vmem:[%s381 + $0x238] sm:$0xff] %v1016
        %1145 = vst [vmem:[%s381 + $0x240] sm:$0xff] %v1017
        %1146 = vst [vmem:[%s381 + $0x248] sm:$0xff] %v1018
        %1147 = vst [vmem:[%s381 + $0x250] sm:$0xff] %v1019
        %1148 = vst [vmem:[%s381 + $0x258] sm:$0xff] %v1020
        %1149 = vst [vmem:[%s381 + $0x260] sm:$0xff] %v1021
        %1150 = vst [vmem:[%s381 + $0x268] sm:$0xff] %v1022
        %1151 = vst [vmem:[%s381 + $0x270] sm:$0xff] %v1023
        %1152 = vst [vmem:[%s381 + $0x278] sm:$0xff] %v1024
        %1153 = vst [vmem:[%s381 + $0x280] sm:$0xff] %v1025
        %1154 = vst [vmem:[%s381 + $0x288] sm:$0xff] %v1026
        %1155 = vst [vmem:[%s381 + $0x290] sm:$0xff] %v1027
        %1156 = vst [vmem:[%s381 + $0x298] sm:$0xff] %v1028
        %1157 = vst [vmem:[%s381 + $0x2a0] sm:$0xff] %v1029
        %1158 = vst [vmem:[%s381 + $0x2a8] sm:$0xff] %v1030
        %1159 = vst [vmem:[%s381 + $0x2b0] sm:$0xff] %v1031
        %1160 = vst [vmem:[%s381 + $0x2b8] sm:$0xff] %v1032
        %1161 = vst [vmem:[%s381 + $0x2c0] sm:$0xff] %v1033
        %1162 = vst [vmem:[%s381 + $0x2c8] sm:$0xff] %v1034
        %1163 = vst [vmem:[%s381 + $0x2d0] sm:$0xff] %v1035
        %1164 = vst [vmem:[%s381 + $0x2d8] sm:$0xff] %v1036
        %1165 = vst [vmem:[%s381 + $0x2e0] sm:$0xff] %v1037
        %1166 = vst [vmem:[%s381 + $0x2e8] sm:$0xff] %v1038
        %1167 = vst [vmem:[%s381 + $0x2f0] sm:$0xff] %v1039
        %1168 = vst [vmem:[%s381 + $0x2f8] sm:$0xff] %v1040
        %1169 = vst [vmem:[%s381 + $0x300] sm:$0xff] %v1041
        %1170 = vst [vmem:[%s381 + $0x308] sm:$0xff] %v1042
        %1171 = vst [vmem:[%s381 + $0x310] sm:$0xff] %v1043
        %1172 = vst [vmem:[%s381 + $0x318] sm:$0xff] %v1044
        %1173 = vst [vmem:[%s381 + $0x320] sm:$0xff] %v1045
        %1174 = vst [vmem:[%s381 + $0x328] sm:$0xff] %v1046
        %1175 = vst [vmem:[%s381 + $0x330] sm:$0xff] %v1047
        %1176 = vst [vmem:[%s381 + $0x338] sm:$0xff] %v1048
        %1177 = vst [vmem:[%s381 + $0x340] sm:$0xff] %v1049
        %1178 = vst [vmem:[%s381 + $0x348] sm:$0xff] %v1050
        %1179 = vst [vmem:[%s381 + $0x350] sm:$0xff] %v1051
        %1180 = vst [vmem:[%s381 + $0x358] sm:$0xff] %v1052
        %1181 = vst [vmem:[%s381 + $0x360] sm:$0xff] %v1053
        %1182 = vst [vmem:[%s381 + $0x368] sm:$0xff] %v1054
        %1183 = vst [vmem:[%s381 + $0x370] sm:$0xff] %v1055
        %1184 = vst [vmem:[%s381 + $0x378] sm:$0xff] %v1056
        %1185 = vst [vmem:[%s381 + $0x380] sm:$0xff] %v1057
        %1186 = vst [vmem:[%s381 + $0x388] sm:$0xff] %v1058
        %1187 = vst [vmem:[%s381 + $0x390] sm:$0xff] %v1059
        %1188 = vst [vmem:[%s381 + $0x398] sm:$0xff] %v1060
        %1189 = vst [vmem:[%s381 + $0x3a0] sm:$0xff] %v1061
        %1190 = vst [vmem:[%s381 + $0x3a8] sm:$0xff] %v1062
        %1191 = vst [vmem:[%s381 + $0x3b0] sm:$0xff] %v1063
        %1192 = vst [vmem:[%s381 + $0x3b8] sm:$0xff] %v1064
        %1193 = vst [vmem:[%s381 + $0x3c0] sm:$0xff] %v1065
        %1194 = vst [vmem:[%s381 + $0x3c8] sm:$0xff] %v1066
        %1195 = vst [vmem:[%s381 + $0x3d0] sm:$0xff] %v1067
        %1196 = vst [vmem:[%s381 + $0x3d8] sm:$0xff] %v1068
        %1197 = vst [vmem:[%s381 + $0x3e0] sm:$0xff] %v1069
        %1198 = vst [vmem:[%s381 + $0x3e8] sm:$0xff] %v1070
        %1199 = vst [vmem:[%s381 + $0x3f0] sm:$0xff] %v1071
        %1200 = vst [vmem:[%s381 + $0x3f8] sm:$0xff] %v1072
        %s1201 = sand.u32 %s149, 1
        %s1202 = scalar_lea.sflag [#allocation6], %s1201
        %s1203 = sand.u32 %s149, 1
        %s1204 = smul.addr %s1203, 1024
        %s1205 = scalar_lea.vmem [#allocation12], %s1204
        %s1206 = sand.u32 %s31, 1
        %s1207 = scalar_lea.sflag [#allocation14], %s1206
        %s1208 = sand.u32 %s175, 1
        %s1209 = smul.addr %s1208, 8
        %s1210 = scalar_lea.vmem [#allocation13], %s1209
        %s1211 = sand.u32 %s31, 1
        %s1212 = scalar_lea.sflag [#allocation14], %s1211
        %s1213 = sand.u32 %s201, 1
        %s1214 = smul.addr %s1213, 8
        %s1215 = scalar_lea.vmem [#allocation15], %s1214
        // Predicated region
        $region57: #{tpu_custom_call.1} parent=35 // pred_check
          %p1216 = pneg %p159
        $region58: #{tpu_custom_call.1} parent=35 // pred_check_branch
          %1218 = sbr.rel (%p1216) target = $region60
        $region59: #{tpu_custom_call.1} parent=35 // pred_region
          #allocation19 [shape = 'u32[6]{0}', space=smem, size = 0x18, scoped, tag = 'DMA stride descriptor']
          %s1219 = smul.u32 8, %s35
          %s1220 = smul.u32 16, %s36
          %s1222 = ssub.s32 16384, 16384
          %1223 = vsyncadd %s1202, %s1222
          %s1224 = smul.addr %s1219, 32
          %s1225 = sadd.s32 %s1220, %s1224
          %s1226 = smul.addr %s1225, 128
          %s1227 = scalar_lea.hbm %s4, %s1226
          %s1229 = sshll.u32 1, 14
          %s1230 = sxor.u32 4294967295, %s1229
          %s1233 = sshll.u32 7, 18
          %s1234 = sxor.u32 4294967295, %s1233
          %s1235 = sand.u32 0, %s1234
          %s1237 = sor.u32 %s1235, 0
          %s1239 = sshll.u32 3, 24
          %s1240 = sxor.u32 4294967295, %s1239
          %s1241 = sand.u32 %s1237, %s1240
          %s1243 = sor.u32 %s1241, 0
          %s1244 = sshll.u32 %s1205, 4
          %s1245 = int_to_ptr.vmem [resolvable:$true] %s1244
          %1251 = sst [smem:[#allocation19]] 2048
          %s1252 = scalar_lea.smem [#allocation19], 1
          %1253 = sst [smem:[%s1252]] 4096
          %s1254 = scalar_lea.smem [#allocation19], 2
          %1255 = sst [smem:[%s1254]] 16
          %s1256 = scalar_lea.smem [#allocation19], 3
          %1257 = sst [smem:[%s1256]] 128
          %s1258 = scalar_lea.smem [#allocation19], 4
          %1259 = sst [smem:[%s1258]] 128
          %s1260 = scalar_lea.smem [#allocation19], 5
          %1261 = sst [smem:[%s1260]] 8
          %1263 = dma.general %s1245, 16384, %s1227, %s1202, [#allocation18], [#allocation19], %s1243, 0
        $region60: #{tpu_custom_call.1} parent=35 // pred_fallthru
          _
        // Predicated region
        $region61: #{tpu_custom_call.1} parent=35 // pred_check
          %p1264 = pneg %p185
        $region62: #{tpu_custom_call.1} parent=35 // pred_check_branch
          %1266 = sbr.rel (%p1264) target = $region64
        $region63: #{tpu_custom_call.1} parent=35 // pred_region
          %s1268 = ssub.s32 128, 128
          %1269 = vsyncadd %s1207, %s1268
          %s1270 = smul.addr %s35, 128
          %s1271 = scalar_lea.hbm %s5, %s1270
          %s1273 = sshll.u32 %s1210, 4
          %s1274 = int_to_ptr.vmem [resolvable:$true] %s1273
          %1276 = dma.vmem_to_hbm [thread:$0]  %s1274, 128, %s1271, %s1207
        $region64: #{tpu_custom_call.1} parent=35 // pred_fallthru
          _
        // Predicated region
        $region65: #{tpu_custom_call.1} parent=35 // pred_check
          %p1277 = pneg %p211
        $region66: #{tpu_custom_call.1} parent=35 // pred_check_branch
          %1279 = sbr.rel (%p1277) target = $region68
        $region67: #{tpu_custom_call.1} parent=35 // pred_region
          %s1281 = ssub.s32 128, 128
          %1282 = vsyncadd %s1212, %s1281
          %s1283 = smul.addr %s35, 128
          %s1284 = scalar_lea.hbm %s6, %s1283
          %s1286 = sshll.u32 %s1215, 4
          %s1287 = int_to_ptr.vmem [resolvable:$true] %s1286
          %1289 = dma.vmem_to_hbm [thread:$0]  %s1287, 128, %s1284, %s1212
        $region68: #{tpu_custom_call.1} parent=35 // pred_fallthru
          _
      $region36: #{tpu_custom_call.1} parent=5 // pred_fallthru
        _
      %p1290 = scmp.le.s32.totalorder 2, %s26
      // Predicated region
      $region69: #{tpu_custom_call.1} parent=5 // pred_check
        %p1291 = pneg %p1290
      $region70: #{tpu_custom_call.1} parent=5 // pred_check_branch
        %1293 = sbr.rel (%p1291) target = $region72
      $region71: #{tpu_custom_call.1} parent=5 // pred_region
        %s1294 = ssub.s32 %s26, 2
        // Predicated region
        $region73: #{tpu_custom_call.1} parent=71 // pred_check
          %p1295 = pneg %p165
        $region74: #{tpu_custom_call.1} parent=71 // pred_check_branch
          %1297 = sbr.rel (%p1295) target = $region76
        $region75: #{tpu_custom_call.1} parent=71 // pred_region
          %s1298 = sand.u32 %s150, 1
          %s1299 = scalar_lea.sflag [#allocation6], %s1298
          %s1300 = sand.u32 %s150, 1
          %s1301 = smul.addr %s1300, 1024
          %s1302 = scalar_lea.vmem [#allocation12], %s1301
          %1303 = dma.done %s1299, 16384
        $region76: #{tpu_custom_call.1} parent=71 // pred_fallthru
          _
        // Predicated region
        $region77: #{tpu_custom_call.1} parent=71 // pred_check
          %p1304 = pneg %p191
        $region78: #{tpu_custom_call.1} parent=71 // pred_check_branch
          %1306 = sbr.rel (%p1304) target = $region80
        $region79: #{tpu_custom_call.1} parent=71 // pred_region
          %s1307 = sand.u32 %s32, 1
          %s1308 = scalar_lea.sflag [#allocation14], %s1307
          %s1309 = sand.u32 %s176, 1
          %s1310 = smul.addr %s1309, 8
          %s1311 = scalar_lea.vmem [#allocation13], %s1310
          %1312 = dma.done %s1308, 128
        $region80: #{tpu_custom_call.1} parent=71 // pred_fallthru
          _
        // Predicated region
        $region81: #{tpu_custom_call.1} parent=71 // pred_check
          %p1313 = pneg %p217
        $region82: #{tpu_custom_call.1} parent=71 // pred_check_branch
          %1315 = sbr.rel (%p1313) target = $region84
        $region83: #{tpu_custom_call.1} parent=71 // pred_region
          %s1316 = sand.u32 %s32, 1
          %s1317 = scalar_lea.sflag [#allocation14], %s1316
          %s1318 = sand.u32 %s202, 1
          %s1319 = smul.addr %s1318, 8
          %s1320 = scalar_lea.vmem [#allocation15], %s1319
          %1321 = dma.done %s1317, 128
        $region84: #{tpu_custom_call.1} parent=71 // pred_fallthru
          _
      $region72: #{tpu_custom_call.1} parent=5 // pred_fallthru
        _
    $region6: #{tpu_custom_call.1} parent=1 // loop_footer
      %s30 = sadd.s32 1, %s26
    $region7: #{tpu_custom_call.1} parent=1 // loop_footer_branch
      %25 = sbr.rel target = $region3
    $region8: #{tpu_custom_call.1} parent=1 // loop_exit
      _
    %1322 = vsyncpa [#allocation5], 1
    %s1323 = scalar_lea.sflag [#allocation5], 1
    %1324 = vsyncpa %s1323, 1
    %1325 = vsyncpa [#allocation8], 1
    %1326 = vsyncpa [#allocation11], 1
    %s1327 = scalar_lea.sflag [#allocation11], 1
    %1328 = vsyncpa %s1327, 1
    %1329 = vsyncpa [#allocation6], 1
    %s1330 = scalar_lea.sflag [#allocation6], 1
    %1331 = vsyncpa %s1330, 1
    %1332 = vsyncpa [#allocation14], 1
    %s1333 = scalar_lea.sflag [#allocation14], 1
    %1334 = vsyncpa %s1333, 1

</llo_original>
